<compile_context>
chip_gen: v7x
topology: tpu7x:2x2x1
jax: 0.10.0
libtpu: 0.0.40
codegen_flags: <defaults>
</compile_context>

<pallas_src>
import functools

import jax
import jax.numpy as jnp
from jax.experimental import pallas as pl
from jax.experimental.pallas import tpu as pltpu


def _round_up(n, m):
    return ((n + m - 1) // m) * m


def _mvr_proxy_kernel(emb_ref, prox_ref, psq_ref, lab_ref, out_ref, *, reg):
    x = emb_ref[...]                         # (TB, D) f32
    P = prox_ref[...]                        # (C, D)  f32
    psq = psq_ref[...]                       # (1, C)  f32  == ||P_j||^2
    lab = lab_ref[...]                       # (TB, 1) i32

    TB = x.shape[0]
    C = P.shape[0]

    # ---- pairwise Euclidean distances via the MXU -------------------------
    xx = jnp.sum(x * x, axis=1, keepdims=True)                       # (TB, 1)
    xP = jax.lax.dot_general(x, P, (((1,), (1,)), ((), ())),
                             preferred_element_type=jnp.float32)     # (TB, C)
    dist2 = jnp.maximum(xx + psq - 2.0 * xP, 0.0)                    # clamp cancellation
    dist = jnp.sqrt(dist2)                                           # (TB, C)

    # ---- one-hot positive-proxy mask --------------------------------------
    cls = jax.lax.broadcasted_iota(jnp.int32, (TB, C), 1)
    is_pos = cls == lab                                              # (TB, C) bool
    oh = is_pos.astype(jnp.float32)

    # positive distance euc_p[b] = dist[b, label_b] = ||P[label_b] - x_b||
    euc_p = jnp.sum(dist * oh, axis=1, keepdims=True)                # (TB, 1)

    # fp = P[label] - x  (one-hot matmul on the MXU); its norm equals euc_p.
    fp = jnp.dot(oh, P, preferred_element_type=jnp.float32) - x      # (TB, D)
    nfp = fp * pl.reciprocal(jnp.maximum(euc_p, 1e-30))              # (TB, D)

    # cos[b, j] = <(P_j - x_b), nfp_b> / dist[b, j]
    nfpP = jax.lax.dot_general(nfp, P, (((1,), (1,)), ((), ())),
                               preferred_element_type=jnp.float32)   # (TB, C)
    x_dot_nfp = jnp.sum(x * nfp, axis=1, keepdims=True)              # (TB, 1)
    cos = (nfpP - x_dot_nfp) * pl.reciprocal(jnp.maximum(dist, 1e-30))

    # denominator over the negative proxies only (positive column masked out)
    exp_den = jnp.where(is_pos, 0.0, jnp.exp(-(dist + reg * cos)))   # (TB, C)
    denom = jnp.sum(exp_den, axis=1, keepdims=True)                  # (TB, 1)

    # -log(exp(-euc_p) / denom) == euc_p + log(denom)
    out_ref[...] = euc_p + jnp.log(denom)                            # (TB, 1)


def mvr_proxy_loss(embeddings, labels, proxies, reg, *, tile_b=128):
    """Pallas implementation of MVR_Proxy.forward -> scalar mean loss."""
    x = embeddings.astype(jnp.float32)
    P = proxies.astype(jnp.float32)
    lab = labels.astype(jnp.int32).reshape(-1)
    B, D = x.shape
    C = P.shape[0]

    # Batch tile: multiple of 8 (sublane), capped at tile_b.
    TB = min(tile_b, _round_up(B, 8))
    B_pad = _round_up(B, TB)
    if B_pad != B:
        x = jnp.pad(x, ((0, B_pad - B), (0, 0)))
        lab = jnp.pad(lab, (0, B_pad - B))      # padded rows sliced away below
    lab2 = lab.reshape(B_pad, 1)

    # ||P_j||^2 precomputed once (a function of the proxies only).
    psq = jnp.sum(P * P, axis=1)[None, :]       # (1, C)

    grid = (B_pad // TB,)
    per_sample = pl.pallas_call(
        functools.partial(_mvr_proxy_kernel, reg=float(reg)),
        out_shape=jax.ShapeDtypeStruct((B_pad, 1), jnp.float32),
        grid=grid,
        in_specs=[
            pl.BlockSpec((TB, D), lambda i: (i, 0)),   # embeddings (batch-tiled)
            pl.BlockSpec((C, D), lambda i: (0, 0)),    # proxies    (resident)
            pl.BlockSpec((1, C), lambda i: (0, 0)),    # ||P||^2    (resident)
            pl.BlockSpec((TB, 1), lambda i: (i, 0)),   # labels     (batch-tiled)
        ],
        out_specs=pl.BlockSpec((TB, 1), lambda i: (i, 0)),
        compiler_params=pltpu.CompilerParams(
            dimension_semantics=("parallel",)),
    )(x, P, psq, lab2)

    # Trivial O(B) mean done by XLA (keeps the batch grid axis "parallel").
    return jnp.mean(per_sample[:B, 0])


def mvr_proxy_loss_ref(embeddings, labels, proxies, reg):
    """Plain-JAX reference mirroring the PyTorch forward (sanity check)."""
    x = embeddings.astype(jnp.float32)
    P = proxies.astype(jnp.float32)
    lab = labels.astype(jnp.int32)
    diff = P[None, :, :] - x[:, None, :]
    dist = jnp.sqrt(jnp.sum(diff * diff, axis=2))
    B, C = dist.shape
    is_pos = jax.lax.broadcasted_iota(jnp.int32, (B, C), 1) == lab[:, None]
    euc_p = jnp.sum(dist * is_pos, axis=1)
    fp = P[lab] - x
    nfp = fp / jnp.linalg.norm(fp, axis=1, keepdims=True)
    cos = jnp.sum(diff * nfp[:, None, :], axis=2) / dist
    exp_den = jnp.where(is_pos, 0.0, jnp.exp(-(dist + reg * cos)))
    denom = jnp.sum(exp_den, axis=1)
    return jnp.mean(-jnp.log(jnp.exp(-euc_p) / denom))


if __name__ == "__main__":
    # Module config: MVR_Proxy(reg, no_class, embedding_dimension)
    reg = 0.1
    no_class = 10
    emb_dim = 32

    key = jax.random.PRNGKey(0)
    k_prox, k_emb1, k_lab1, k_emb2, k_lab2 = jax.random.split(key, 5)

    # Deterministic proxy init (randn rows, L2-normalized), like __init__.
    proxies = jax.random.normal(k_prox, (no_class, emb_dim), dtype=jnp.float32)
    proxies = proxies / jnp.linalg.norm(proxies, axis=1, keepdims=True)

    # Case 1: single-tile path (B=8).
    emb1 = jax.random.normal(k_emb1, (8, emb_dim), dtype=jnp.float32)
    lab1 = jax.random.randint(k_lab1, (8,), 0, no_class, dtype=jnp.int32)
    loss1 = jax.block_until_ready(mvr_proxy_loss(emb1, lab1, proxies, reg))
    ref1 = jax.block_until_ready(mvr_proxy_loss_ref(emb1, lab1, proxies, reg))
    assert jnp.isfinite(loss1), "loss1 is not finite"
    assert jnp.allclose(loss1, ref1, rtol=1e-4, atol=1e-5), (loss1, ref1)

    # Case 2: multi-tile + padding path (B=37, TB=16 -> grid of 3, 11 pad rows).
    emb2 = jax.random.normal(k_emb2, (37, emb_dim), dtype=jnp.float32)
    lab2 = jax.random.randint(k_lab2, (37,), 0, no_class, dtype=jnp.int32)
    loss2 = jax.block_until_ready(
        mvr_proxy_loss(emb2, lab2, proxies, reg, tile_b=16))
    ref2 = jax.block_until_ready(mvr_proxy_loss_ref(emb2, lab2, proxies, reg))
    assert jnp.isfinite(loss2), "loss2 is not finite"
    assert jnp.allclose(loss2, ref2, rtol=1e-4, atol=1e-5), (loss2, ref2)

    print("KERNEL_OK")
</pallas_src>

<mosaic_0001>
module attributes {stable_mosaic.version = 11 : i64} {
  func.func @_mvr_proxy_kernel(%arg0: i32, %arg1: memref<8x32xf32, #tpu.memory_space<vmem>>, %arg2: memref<10x32xf32, #tpu.memory_space<vmem>>, %arg3: memref<1x10xf32, #tpu.memory_space<vmem>>, %arg4: memref<8x1xi32, #tpu.memory_space<vmem>>, %arg5: memref<8x1xf32, #tpu.memory_space<vmem>>) attributes {dimension_semantics = [#tpu.dimension_semantics<parallel>], iteration_bounds = array<i64: 1>, scalar_prefetch = 0 : i64, scratch_operands = 0 : i64, tpu.core_type = #tpu.core_type<tc>, window_params = [{transform_indices = @transform_0, window_bounds = array<i64: 8, 32>}, {pipeline_mode = #tpu.pipeline_mode<synchronous>, transform_indices = @transform_1, window_bounds = array<i64: 10, 32>}, {pipeline_mode = #tpu.pipeline_mode<synchronous>, transform_indices = @transform_2, window_bounds = array<i64: 1, 10>}, {transform_indices = @transform_3, window_bounds = array<i64: 8, 1>}, {transform_indices = @transform_4, window_bounds = array<i64: 8, 1>}]} {
    %c0 = arith.constant 0 : index
    %c0_0 = arith.constant 0 : index
    %0 = vector.load %arg1[%c0, %c0_0] : memref<8x32xf32, #tpu.memory_space<vmem>>, vector<8x32xf32>
    %c0_1 = arith.constant 0 : index
    %c0_2 = arith.constant 0 : index
    %1 = vector.load %arg2[%c0_1, %c0_2] : memref<10x32xf32, #tpu.memory_space<vmem>>, vector<10x32xf32>
    %c0_3 = arith.constant 0 : index
    %c0_4 = arith.constant 0 : index
    %2 = vector.load %arg3[%c0_3, %c0_4] : memref<1x10xf32, #tpu.memory_space<vmem>>, vector<1x10xf32>
    %c0_5 = arith.constant 0 : index
    %c0_6 = arith.constant 0 : index
    %3 = vector.load %arg4[%c0_5, %c0_6] : memref<8x1xi32, #tpu.memory_space<vmem>>, vector<8x1xi32>
    %4 = arith.mulf %0, %0 : vector<8x32xf32>
    %cst = arith.constant dense<0.000000e+00> : vector<8xf32>
    %5 = vector.multi_reduction <add>, %4, %cst [1] : vector<8x32xf32> to vector<8xf32>
    %6 = vector.shape_cast %5 : vector<8xf32> to vector<8x1xf32>
    %cst_7 = arith.constant dense<0.000000e+00> : vector<8x10xf32>
    %7 = tpu.matmul %0, %1, %cst_7 {dimension_numbers = #tpu.dot_dimension_numbers<[1], [1], [0], [0], [0, 0, 1, 0], [], []>} : vector<8x32xf32>, vector<10x32xf32>, vector<8x10xf32> -> vector<8x10xf32>
    %8 = vector.broadcast %6 : vector<8x1xf32> to vector<8x10xf32>
    %9 = vector.broadcast %2 : vector<1x10xf32> to vector<8x10xf32>
    %10 = arith.addf %8, %9 : vector<8x10xf32>
    %cst_8 = arith.constant 2.000000e+00 : f32
    %11 = vector.broadcast %cst_8 : f32 to vector<8x10xf32>
    %12 = arith.mulf %11, %7 : vector<8x10xf32>
    %13 = arith.subf %10, %12 : vector<8x10xf32>
    %cst_9 = arith.constant 0.000000e+00 : f32
    %14 = vector.broadcast %cst_9 : f32 to vector<8x10xf32>
    %15 = arith.maximumf %13, %14 : vector<8x10xf32>
    %16 = math.sqrt %15 : vector<8x10xf32>
    %17 = tpu.iota {dimensions = array<i32: 1>} : vector<8x10xi32>
    %18 = vector.broadcast %3 : vector<8x1xi32> to vector<8x10xi32>
    %19 = arith.cmpi eq, %17, %18 : vector<8x10xi32>
    %20 = arith.extui %19 : vector<8x10xi1> to vector<8x10xi32>
    %21 = arith.sitofp %20 : vector<8x10xi32> to vector<8x10xf32>
    %22 = arith.mulf %16, %21 : vector<8x10xf32>
    %cst_10 = arith.constant dense<0.000000e+00> : vector<8xf32>
    %23 = vector.multi_reduction <add>, %22, %cst_10 [1] : vector<8x10xf32> to vector<8xf32>
    %24 = vector.shape_cast %23 : vector<8xf32> to vector<8x1xf32>
    %cst_11 = arith.constant dense<0.000000e+00> : vector<8x32xf32>
    %25 = tpu.matmul %21, %1, %cst_11 {dimension_numbers = #tpu.dot_dimension_numbers<[1], [0], [0], [1], [0, 0, 1, 1], [], []>} : vector<8x10xf32>, vector<10x32xf32>, vector<8x32xf32> -> vector<8x32xf32>
    %26 = arith.subf %25, %0 : vector<8x32xf32>
    %cst_12 = arith.constant 1.000000e-30 : f32
    %27 = vector.broadcast %cst_12 : f32 to vector<8x1xf32>
    %28 = arith.maximumf %24, %27 : vector<8x1xf32>
    %29 = tpu.reciprocal %28 : vector<8x1xf32> -> vector<8x1xf32>
    %30 = vector.broadcast %29 : vector<8x1xf32> to vector<8x32xf32>
    %31 = arith.mulf %26, %30 : vector<8x32xf32>
    %cst_13 = arith.constant dense<0.000000e+00> : vector<8x10xf32>
    %32 = tpu.matmul %31, %1, %cst_13 {dimension_numbers = #tpu.dot_dimension_numbers<[1], [1], [0], [0], [0, 0, 1, 0], [], []>} : vector<8x32xf32>, vector<10x32xf32>, vector<8x10xf32> -> vector<8x10xf32>
    %33 = arith.mulf %0, %31 : vector<8x32xf32>
    %cst_14 = arith.constant dense<0.000000e+00> : vector<8xf32>
    %34 = vector.multi_reduction <add>, %33, %cst_14 [1] : vector<8x32xf32> to vector<8xf32>
    %35 = vector.shape_cast %34 : vector<8xf32> to vector<8x1xf32>
    %36 = vector.broadcast %35 : vector<8x1xf32> to vector<8x10xf32>
    %37 = arith.subf %32, %36 : vector<8x10xf32>
    %cst_15 = arith.constant 1.000000e-30 : f32
    %38 = vector.broadcast %cst_15 : f32 to vector<8x10xf32>
    %39 = arith.maximumf %16, %38 : vector<8x10xf32>
    %40 = tpu.reciprocal %39 : vector<8x10xf32> -> vector<8x10xf32>
    %41 = arith.mulf %37, %40 : vector<8x10xf32>
    %cst_16 = arith.constant 1.000000e-01 : f32
    %42 = vector.broadcast %cst_16 : f32 to vector<8x10xf32>
    %43 = arith.mulf %42, %41 : vector<8x10xf32>
    %44 = arith.addf %16, %43 : vector<8x10xf32>
    %cst_17 = arith.constant 0.000000e+00 : f32
    %45 = vector.broadcast %cst_17 : f32 to vector<8x10xf32>
    %46 = arith.subf %45, %44 : vector<8x10xf32>
    %47 = math.exp %46 : vector<8x10xf32>
    %cst_18 = arith.constant 0.000000e+00 : f32
    %48 = vector.broadcast %cst_18 : f32 to vector<8x10xf32>
    %49 = arith.select %19, %48, %47 : vector<8x10xi1>, vector<8x10xf32>
    %cst_19 = arith.constant dense<0.000000e+00> : vector<8xf32>
    %50 = vector.multi_reduction <add>, %49, %cst_19 [1] : vector<8x10xf32> to vector<8xf32>
    %51 = vector.shape_cast %50 : vector<8xf32> to vector<8x1xf32>
    %52 = math.log %51 : vector<8x1xf32>
    %53 = arith.addf %24, %52 : vector<8x1xf32>
    %c0_20 = arith.constant 0 : index
    %c0_21 = arith.constant 0 : index
    %54 = vector.load %arg5[%c0_20, %c0_21] : memref<8x1xf32, #tpu.memory_space<vmem>>, vector<8x1xf32>
    tpu.vector_store %arg5[%c0_20, %c0_21], %53 {strides = array<i32>} : memref<8x1xf32, #tpu.memory_space<vmem>>, vector<8x1xf32>,
    return
  }
  func.func @transform_0(%arg0: i32) -> (i32, i32) {
    %c0_i32 = arith.constant 0 : i32
    %c0_i32_0 = arith.constant 0 : i32
    return %arg0, %c0_i32 : i32, i32
  }
  func.func @transform_1(%arg0: i32) -> (i32, i32) {
    %c0_i32 = arith.constant 0 : i32
    %c0_i32_0 = arith.constant 0 : i32
    %c0_i32_1 = arith.constant 0 : i32
    return %c0_i32, %c0_i32_0 : i32, i32
  }
  func.func @transform_2(%arg0: i32) -> (i32, i32) {
    %c0_i32 = arith.constant 0 : i32
    %c0_i32_0 = arith.constant 0 : i32
    %c0_i32_1 = arith.constant 0 : i32
    return %c0_i32, %c0_i32_0 : i32, i32
  }
  func.func @transform_3(%arg0: i32) -> (i32, i32) {
    %c0_i32 = arith.constant 0 : i32
    %c0_i32_0 = arith.constant 0 : i32
    return %arg0, %c0_i32 : i32, i32
  }
  func.func @transform_4(%arg0: i32) -> (i32, i32) {
    %c0_i32 = arith.constant 0 : i32
    %c0_i32_0 = arith.constant 0 : i32
    return %arg0, %c0_i32 : i32, i32
  }
}

</mosaic_0001>

<llo_original>
// kernel: tpu_custom_call.1
$region0: #{tpu_custom_call.1}
  #allocation0 [shape = 'u32[]', space=smem, size = 0x4, offset = 0x4, fixed_abs, tag = 'smem constant byte address 0x4 - core index']
  #allocation1 [shape = 'u32[144,128]{1,0:T(1,128)}', space=vmem, size = 0x12000, scoped, tag = 'internal scratch']
  %s0 = inlined_call_operand.vmem [shape: f32[8,32], index: 0, kind: input, shape index: {}]
  %s1 = inlined_call_operand.hbm [shape: f32[10,32], index: 1, kind: input, shape index: {}]
  %s2 = inlined_call_operand.vmem [shape: f32[1,10], index: 2, kind: input, shape index: {}]
  %s3 = inlined_call_operand.vmem [shape: s32[8,1], index: 3, kind: input, shape index: {}]
  %s4 = inlined_call_operand.vmem [shape: f32[8,1], index: 4, kind: output, shape index: {}]
  %s5 = sld [smem:[#allocation0]]
  $region30: #{tpu_custom_call.1} parent=0
    _
  %s7 = ssub.s32 1, %s5
  %s8 = scalar_select 0, %s7, %s5
  $region1: #{tpu_custom_call.1} parent=0
    #allocation2 [shape = 'u8[8192]{0}', space=vmem, size = 0x2000, scoped, tag = 'input window, operand 1, single buffered']
    #allocation3 [shape = 's32[1]{0}', space=sflag, size = 0x4, scoped, tag = 'scoped memory for tpu_custom_call.1']
    %9 = vsyncpa [#allocation3], 0
    // Predicated region
    $region2: #{tpu_custom_call.1} parent=1 // pred_check
      _
    $region3: #{tpu_custom_call.1} parent=1 // pred_check_branch
      %11 = sbr.rel (0) target = $region5
    $region4: #{tpu_custom_call.1} parent=1 // pred_region
      _
    $region5: #{tpu_custom_call.1} parent=1 // pred_fallthru
      _
    // Predicated region
    $region6: #{tpu_custom_call.1} parent=1 // pred_check
      _
    $region7: #{tpu_custom_call.1} parent=1 // pred_check_branch
      %13 = sbr.rel (0) target = $region9
    $region8: #{tpu_custom_call.1} parent=1 // pred_region
      %s15 = ssub.s32 256, 256
      %16 = vsyncadd [#allocation3], %s15
      %s17 = sshll.u32 [#allocation2], 4
      %s18 = int_to_ptr.vmem [resolvable:$true] %s17
      %23 = dma.hbm_to_vmem [thread:$0]  %s1, 256, %s18, [#allocation3], 128, 128, 8
    $region9: #{tpu_custom_call.1} parent=1 // pred_fallthru
      _
    // Predicated region
    $region10: #{tpu_custom_call.1} parent=1 // pred_check
      _
    $region11: #{tpu_custom_call.1} parent=1 // pred_check_branch
      %25 = sbr.rel (0) target = $region13
    $region12: #{tpu_custom_call.1} parent=1 // pred_region
      _
    $region13: #{tpu_custom_call.1} parent=1 // pred_fallthru
      _
    // Predicated region
    $region14: #{tpu_custom_call.1} parent=1 // pred_check
      _
    $region15: #{tpu_custom_call.1} parent=1 // pred_check_branch
      %27 = sbr.rel (0) target = $region17
    $region16: #{tpu_custom_call.1} parent=1 // pred_region
      _
    $region17: #{tpu_custom_call.1} parent=1 // pred_fallthru
      _
    // Predicated region
    $region18: #{tpu_custom_call.1} parent=1 // pred_check
      _
    $region19: #{tpu_custom_call.1} parent=1 // pred_check_branch
      %29 = sbr.rel (0) target = $region21
    $region20: #{tpu_custom_call.1} parent=1 // pred_region
      %30 = dma.done [#allocation3], 256
    $region21: #{tpu_custom_call.1} parent=1 // pred_fallthru
      _
    %v31 = vld [vmem:[%s0] sm:$0xff]
    %v32 = vld [vmem:[#allocation2] sm:$0xff]
    %v33 = vld [vmem:[#allocation2 + $0x8] sm:$0x3]
    %v34 = vld [vmem:[%s2] sm:$0x1]
    %v35 = vld [vmem:[%s3] sm:$0xff]
    %v36 = vmul.f32 %v31, %v31
    %vm37 = vcmask 261120
    %v38 = vsel %vm37, %v36, 0.0
    %39 = vadd.xlane.f32.xlu0 %v38
    %v40 = vpop.xlane.xlu0 %39
    %v42 = vsel %vm37, %v31, 0
    %v45 = vsel %vm37, %v32, 0
    %v48 = vsel %vm37, %v33, 0
    %50 = vmatprep.subr.mxu0 0.0
    %51 = vmatpush1.xpose.msra.mxu0 %v45
    %52 = vmatprep.subr.mxu0 0.0
    %53 = vmatpush1.xpose.msra.mxu0 %v48
    %54 = vmatprep.subr.mxu0 0.0
    %55 = vmatpush1.xpose.msra.mxu0 0.0
    %56 = vmatprep.subr.mxu0 0.0
    %57 = vmatpush1.xpose.msra.mxu0 0.0
    %58 = vmatprep.subr.mxu0 0.0
    %59 = vmatpush1.xpose.msra.mxu0 0.0
    %60 = vmatprep.subr.mxu0 0.0
    %61 = vmatpush1.xpose.msra.mxu0 0.0
    %62 = vmatprep.subr.mxu0 0.0
    %63 = vmatpush1.xpose.msra.mxu0 0.0
    %64 = vmatprep.subr.mxu0 0.0
    %65 = vmatpush1.xpose.msra.mxu0 0.0
    %66 = vmatprep.subr.mxu0 0.0
    %67 = vmatpush1.xpose.msra.mxu0 0.0
    %68 = vmatprep.subr.mxu0 0.0
    %69 = vmatpush1.xpose.msra.mxu0 0.0
    %70 = vmatprep.subr.mxu0 0.0
    %71 = vmatpush1.xpose.msra.mxu0 0.0
    %72 = vmatprep.subr.mxu0 0.0
    %73 = vmatpush1.xpose.msra.mxu0 0.0
    %74 = vmatprep.subr.mxu0 0.0
    %75 = vmatpush1.xpose.msra.mxu0 0.0
    %76 = vmatprep.subr.mxu0 0.0
    %77 = vmatpush1.xpose.msra.mxu0 0.0
    %78 = vmatprep.subr.mxu0 0.0
    %79 = vmatpush1.xpose.msra.mxu0 0.0
    %80 = vmatprep.subr.mxu0 0.0
    %81 = vmatpush1.xpose.msra.mxu0 0.0
    %82 = vmatprep.subr.mxu0 0.0
    %83 = vmatpush1.xpose.msra.mxu0 0.0
    %84 = vmatprep.subr.mxu0 0.0
    %85 = vmatpush1.xpose.msra.mxu0 0.0
    %86 = vmatprep.subr.mxu0 0.0
    %87 = vmatpush1.xpose.msra.mxu0 0.0
    %88 = vmatprep.subr.mxu0 0.0
    %89 = vmatpush1.xpose.msra.mxu0 0.0
    %90 = vmatprep.subr.mxu0 0.0
    %91 = vmatpush1.xpose.msra.mxu0 0.0
    %92 = vmatprep.subr.mxu0 0.0
    %93 = vmatpush1.xpose.msra.mxu0 0.0
    %94 = vmatprep.subr.mxu0 0.0
    %95 = vmatpush1.xpose.msra.mxu0 0.0
    %96 = vmatprep.subr.mxu0 0.0
    %97 = vmatpush1.xpose.msra.mxu0 0.0
    %98 = vmatprep.subr.mxu0 0.0
    %99 = vmatpush1.xpose.msra.mxu0 0.0
    %100 = vmatprep.subr.mxu0 0.0
    %101 = vmatpush1.xpose.msra.mxu0 0.0
    %102 = vmatprep.subr.mxu0 0.0
    %103 = vmatpush1.xpose.msra.mxu0 0.0
    %104 = vmatprep.subr.mxu0 0.0
    %105 = vmatpush1.xpose.msra.mxu0 0.0
    %106 = vmatprep.subr.mxu0 0.0
    %107 = vmatpush1.xpose.msra.mxu0 0.0
    %108 = vmatprep.subr.mxu0 0.0
    %109 = vmatpush1.xpose.msra.mxu0 0.0
    %110 = vmatprep.subr.mxu0 0.0
    %111 = vmatpush1.xpose.msra.mxu0 0.0
    %112 = vmatprep.subr.mxu0 0.0
    %113 = vmatpush1.xpose.msra.mxu0 0.0
    %114 = vmatprep.mubr.f32.mxu0 0.0
    %115 = vmatmul.mubr.f32.gmra.mrb[0].mxu0 %v42
    %v116 = vpop.f32.mrb[0].mxu0
    %v117 = vadd.f32 0.0, %v116
    %v118 = vpop.f32.mrb[0].mxu0
    %119 = vdwg.mxu0
    %v121 = vlaneseq
    %v122 = vshrl.u32 %v121, 7
    %v123 = vsub.s32 0, %v122
    %v124 = vrot.slane %v34, %v123
    %v126 = vadd.f32 %v40, %v124
    %v127 = vmul.f32 %v117, 2.0
    %v128 = vsub.f32 %v126, %v127
    %v129 = vmax.f32 %v128, 0.0
    %v130 = vrsqrt.pop %v129
    %v131 = vmul.f32 %v129, %v130
    %vm132 = vcmp.eq.f32.partialorder %v129, inf
    %v133 = vsel %vm132, %v129, %v131
    %vm134 = vcmp.eq.f32.partialorder %v129, 0.0
    %v135 = vand.u32 %v129, 2147483648
    %v136 = vsel %vm134, %v135, %v133
    %v137 = vlaneseq
    %v138 = vand.u32 %v137, 127
    %139 = vset.pattern.permute.xlu0 0
    %140 = vperm.xlu0 %139, %v35
    %v141 = vpop.permute.xlu0 %140
    %vm142 = vcmp.eq.s32.totalorder %v138, %v141
    %v143 = vsel %vm142, 1, 0
    %v144 = vcvt.s32.f32 %v143
    %v145 = vmul.f32 %v136, %v144
    %vm146 = vcmask 80896
    %v147 = vsel %vm146, %v145, 0.0
    %148 = vadd.xlane.f32.xlu0 %v147
    %v149 = vpop.xlane.xlu0 %148
    %v151 = vsel %vm146, %v144, 0
    %vm153 = vcmask 1041408
    %v154 = vsel %vm153, %v33, 0
    %156 = vmatprep.subr.mxu0 0.0
    %157 = vmatpush1.msra.mxu0 %v32
    %158 = vmatprep.subr.mxu0 0.0
    %159 = vmatpush1.msra.mxu0 %v154
    %160 = vmatprep.subr.mxu0 0.0
    %161 = vmatpush1.msra.mxu0 0.0
    %162 = vmatprep.subr.mxu0 0.0
    %163 = vmatpush1.msra.mxu0 0.0
    %164 = vmatprep.subr.mxu0 0.0
    %165 = vmatpush1.msra.mxu0 0.0
    %166 = vmatprep.subr.mxu0 0.0
    %167 = vmatpush1.msra.mxu0 0.0
    %168 = vmatprep.subr.mxu0 0.0
    %169 = vmatpush1.msra.mxu0 0.0
    %170 = vmatprep.subr.mxu0 0.0
    %171 = vmatpush1.msra.mxu0 0.0
    %172 = vmatprep.subr.mxu0 0.0
    %173 = vmatpush1.msra.mxu0 0.0
    %174 = vmatprep.subr.mxu0 0.0
    %175 = vmatpush1.msra.mxu0 0.0
    %176 = vmatprep.subr.mxu0 0.0
    %177 = vmatpush1.msra.mxu0 0.0
    %178 = vmatprep.subr.mxu0 0.0
    %179 = vmatpush1.msra.mxu0 0.0
    %180 = vmatprep.subr.mxu0 0.0
    %181 = vmatpush1.msra.mxu0 0.0
    %182 = vmatprep.subr.mxu0 0.0
    %183 = vmatpush1.msra.mxu0 0.0
    %184 = vmatprep.subr.mxu0 0.0
    %185 = vmatpush1.msra.mxu0 0.0
    %186 = vmatprep.subr.mxu0 0.0
    %187 = vmatpush1.msra.mxu0 0.0
    %188 = vmatprep.subr.mxu0 0.0
    %189 = vmatpush1.msra.mxu0 0.0
    %190 = vmatprep.subr.mxu0 0.0
    %191 = vmatpush1.msra.mxu0 0.0
    %192 = vmatprep.subr.mxu0 0.0
    %193 = vmatpush1.msra.mxu0 0.0
    %194 = vmatprep.subr.mxu0 0.0
    %195 = vmatpush1.msra.mxu0 0.0
    %196 = vmatprep.subr.mxu0 0.0
    %197 = vmatpush1.msra.mxu0 0.0
    %198 = vmatprep.subr.mxu0 0.0
    %199 = vmatpush1.msra.mxu0 0.0
    %200 = vmatprep.subr.mxu0 0.0
    %201 = vmatpush1.msra.mxu0 0.0
    %202 = vmatprep.subr.mxu0 0.0
    %203 = vmatpush1.msra.mxu0 0.0
    %204 = vmatprep.subr.mxu0 0.0
    %205 = vmatpush1.msra.mxu0 0.0
    %206 = vmatprep.subr.mxu0 0.0
    %207 = vmatpush1.msra.mxu0 0.0
    %208 = vmatprep.subr.mxu0 0.0
    %209 = vmatpush1.msra.mxu0 0.0
    %210 = vmatprep.subr.mxu0 0.0
    %211 = vmatpush1.msra.mxu0 0.0
    %212 = vmatprep.subr.mxu0 0.0
    %213 = vmatpush1.msra.mxu0 0.0
    %214 = vmatprep.subr.mxu0 0.0
    %215 = vmatpush1.msra.mxu0 0.0
    %216 = vmatprep.subr.mxu0 0.0
    %217 = vmatpush1.msra.mxu0 0.0
    %218 = vmatprep.subr.mxu0 0.0
    %219 = vmatpush1.msra.mxu0 0.0
    %220 = vmatprep.mubr.f32.mxu0 0.0
    %221 = vmatmul.mubr.f32.gmra.mrb[0].mxu0 %v151
    %v222 = vpop.f32.mrb[0].mxu0
    %v223 = vadd.f32 0.0, %v222
    %v224 = vpop.f32.mrb[0].mxu0
    %225 = vdwg.mxu0
    %v226 = vsub.f32 %v223, %v31
    %v227 = vmax.f32 %v149, 1e-30
    %v228 = vrcp.pop %v227
    %v229 = vmul.f32 %v226, %v228
    %v231 = vsel %vm37, %v229, 0
    %233 = vmatprep.subr.mxu0 0.0
    %234 = vmatpush1.xpose.msra.mxu0 %v45
    %235 = vmatprep.subr.mxu0 0.0
    %236 = vmatpush1.xpose.msra.mxu0 %v48
    %237 = vmatprep.subr.mxu0 0.0
    %238 = vmatpush1.xpose.msra.mxu0 0.0
    %239 = vmatprep.subr.mxu0 0.0
    %240 = vmatpush1.xpose.msra.mxu0 0.0
    %241 = vmatprep.subr.mxu0 0.0
    %242 = vmatpush1.xpose.msra.mxu0 0.0
    %243 = vmatprep.subr.mxu0 0.0
    %244 = vmatpush1.xpose.msra.mxu0 0.0
    %245 = vmatprep.subr.mxu0 0.0
    %246 = vmatpush1.xpose.msra.mxu0 0.0
    %247 = vmatprep.subr.mxu0 0.0
    %248 = vmatpush1.xpose.msra.mxu0 0.0
    %249 = vmatprep.subr.mxu0 0.0
    %250 = vmatpush1.xpose.msra.mxu0 0.0
    %251 = vmatprep.subr.mxu0 0.0
    %252 = vmatpush1.xpose.msra.mxu0 0.0
    %253 = vmatprep.subr.mxu0 0.0
    %254 = vmatpush1.xpose.msra.mxu0 0.0
    %255 = vmatprep.subr.mxu0 0.0
    %256 = vmatpush1.xpose.msra.mxu0 0.0
    %257 = vmatprep.subr.mxu0 0.0
    %258 = vmatpush1.xpose.msra.mxu0 0.0
    %259 = vmatprep.subr.mxu0 0.0
    %260 = vmatpush1.xpose.msra.mxu0 0.0
    %261 = vmatprep.subr.mxu0 0.0
    %262 = vmatpush1.xpose.msra.mxu0 0.0
    %263 = vmatprep.subr.mxu0 0.0
    %264 = vmatpush1.xpose.msra.mxu0 0.0
    %265 = vmatprep.subr.mxu0 0.0
    %266 = vmatpush1.xpose.msra.mxu0 0.0
    %267 = vmatprep.subr.mxu0 0.0
    %268 = vmatpush1.xpose.msra.mxu0 0.0
    %269 = vmatprep.subr.mxu0 0.0
    %270 = vmatpush1.xpose.msra.mxu0 0.0
    %271 = vmatprep.subr.mxu0 0.0
    %272 = vmatpush1.xpose.msra.mxu0 0.0
    %273 = vmatprep.subr.mxu0 0.0
    %274 = vmatpush1.xpose.msra.mxu0 0.0
    %275 = vmatprep.subr.mxu0 0.0
    %276 = vmatpush1.xpose.msra.mxu0 0.0
    %277 = vmatprep.subr.mxu0 0.0
    %278 = vmatpush1.xpose.msra.mxu0 0.0
    %279 = vmatprep.subr.mxu0 0.0
    %280 = vmatpush1.xpose.msra.mxu0 0.0
    %281 = vmatprep.subr.mxu0 0.0
    %282 = vmatpush1.xpose.msra.mxu0 0.0
    %283 = vmatprep.subr.mxu0 0.0
    %284 = vmatpush1.xpose.msra.mxu0 0.0
    %285 = vmatprep.subr.mxu0 0.0
    %286 = vmatpush1.xpose.msra.mxu0 0.0
    %287 = vmatprep.subr.mxu0 0.0
    %288 = vmatpush1.xpose.msra.mxu0 0.0
    %289 = vmatprep.subr.mxu0 0.0
    %290 = vmatpush1.xpose.msra.mxu0 0.0
    %291 = vmatprep.subr.mxu0 0.0
    %292 = vmatpush1.xpose.msra.mxu0 0.0
    %293 = vmatprep.subr.mxu0 0.0
    %294 = vmatpush1.xpose.msra.mxu0 0.0
    %295 = vmatprep.subr.mxu0 0.0
    %296 = vmatpush1.xpose.msra.mxu0 0.0
    %297 = vmatprep.mubr.f32.mxu0 0.0
    %298 = vmatmul.mubr.f32.gmra.mrb[0].mxu0 %v231
    %v299 = vpop.f32.mrb[0].mxu0
    %v300 = vadd.f32 0.0, %v299
    %v301 = vpop.f32.mrb[0].mxu0
    %302 = vdwg.mxu0
    %v303 = vmul.f32 %v31, %v229
    %v304 = vsel %vm37, %v303, 0.0
    %305 = vadd.xlane.f32.xlu0 %v304
    %v306 = vpop.xlane.xlu0 %305
    %v307 = vsub.f32 %v300, %v306
    %v308 = vmax.f32 %v136, 1e-30
    %v309 = vrcp.pop %v308
    %v310 = vmul.f32 %v307, %v309
    %v311 = vmul.f32 %v310, 0.1
    %v312 = vadd.f32 %v136, %v311
    %v313 = vsub.f32 0.0, %v312
    %v314 = vmul.f32 %v313, 1.442695
    %v315 = vpow.pop %v314
    %v316 = vsel %vm142, 0.0, %v315
    %v317 = vsel %vm146, %v316, 0.0
    %318 = vadd.xlane.f32.xlu0 %v317
    %v319 = vpop.xlane.xlu0 %318
    %v320 = vlog2.pop %v319
    %v321 = vmul.f32 %v320, 0.6931472
    %v322 = vadd.f32 %v149, %v321
    %vm323 = vcmask 7168
    %324 = vst.msk [vmem:[%s4] sm:$0xff] %vm323, %v322
    // Predicated region
    $region22: #{tpu_custom_call.1} parent=1 // pred_check
      _
    $region23: #{tpu_custom_call.1} parent=1 // pred_check_branch
      %326 = sbr.rel (0) target = $region25
    $region24: #{tpu_custom_call.1} parent=1 // pred_region
      _
    $region25: #{tpu_custom_call.1} parent=1 // pred_fallthru
      _
    // Predicated region
    $region26: #{tpu_custom_call.1} parent=1 // pred_check
      _
    $region27: #{tpu_custom_call.1} parent=1 // pred_check_branch
      %328 = sbr.rel (0) target = $region29
    $region28: #{tpu_custom_call.1} parent=1 // pred_region
      _
    $region29: #{tpu_custom_call.1} parent=1 // pred_fallthru
      _
    %329 = vsyncpa [#allocation3], 1

</llo_original>
